<compile_context>
chip_gen: v6e
topology: v6e:2x2x1
jax: 0.10.0
libtpu: 0.0.40
codegen_flags: <defaults>
</compile_context>

<pallas_src>
import jax
import jax.numpy as jnp
from jax.experimental import pallas as pl
from jax.experimental.pallas import tpu as pltpu


def _broadcast_kernel(slots_ref, out_ref):
    # slots_ref: (1, TF)  — flattened learned slots row (resident in VMEM).
    # out_ref:   (TB, TF) — TB batch rows per grid step.
    out_ref[...] = jnp.broadcast_to(slots_ref[...], out_ref.shape)


def _num_tensorcores() -> int:
    """Best-effort TensorCore-per-chip count (1 on v5e/v6e, 2 on v7x)."""
    try:
        info = pltpu.get_tpu_info()
        for attr in ("num_cores", "core_count", "num_tensorcores",
                     "tensorcores_per_chip"):
            v = getattr(info, attr, None)
            if isinstance(v, int) and v > 1:
                return v
    except Exception:
        pass
    return 1


def _sublane_multiple(dtype) -> int:
    # Minimum sublane tile per dtype: 8 (f32), 16 (bf16/f16), 32 (int8/fp8).
    return max(8, 32 // jnp.dtype(dtype).itemsize)


def _choose_lane_tile(flat: int, itemsize: int, max_bytes: int = 1 << 20) -> int:
    """Lane (F-axis) tile: full row unless it exceeds ~1 MiB, then the largest
    128-multiple divisor of F that fits. Non-128-multiple rows are never split."""
    if flat % 128 != 0:
        return flat
    max_lanes = max(128, ((max_bytes // max(itemsize, 1)) // 128) * 128)
    if flat <= max_lanes:
        return flat
    best = 128
    n128 = flat // 128
    d = 1
    while d * d <= n128:
        if n128 % d == 0:
            for q in (d, n128 // d):
                lanes = q * 128
                if best < lanes <= max_lanes:
                    best = lanes
        d += 1
    return best


def _choose_batch_tile(batch_size: int, block_row_bytes: int, sublane: int,
                       cores: int, target_block_bytes: int) -> int:
    """Rows of the output written per grid step: either the whole batch (one
    block) or a dtype-correct sublane multiple bounded by the VMEM budget; only
    split for parallelism when the chip has >1 TensorCore."""
    if batch_size <= sublane:
        return batch_size
    cap = (target_block_bytes // max(block_row_bytes, 1)) // sublane * sublane
    cap = max(sublane, cap)
    tb = min(cap, batch_size)
    if cores > 1 and batch_size > sublane * cores:
        per_core = (pl.cdiv(batch_size, cores) // sublane) * sublane
        tb = min(tb, max(sublane, per_core))
    if tb >= batch_size:
        return batch_size
    return max(sublane, (tb // sublane) * sublane)


def fixed_learned_init_forward(slots: jax.Array, batch_size: int,
                               *, target_block_bytes: int = 8 << 20) -> jax.Array:
    """Expand slots (1, n_slots, dim) -> (batch_size, n_slots, dim) on TPU."""
    _, n_slots, dim = slots.shape
    flat = n_slots * dim
    dtype = slots.dtype
    itemsize = jnp.dtype(dtype).itemsize
    sublane = _sublane_multiple(dtype)
    cores = _num_tensorcores()

    slots_2d = slots.reshape(1, flat)  # lane-dense flattened parameter row

    tf = _choose_lane_tile(flat, itemsize)
    tb = _choose_batch_tile(batch_size, tf * itemsize, sublane, cores,
                            target_block_bytes)
    grid = (pl.cdiv(batch_size, tb), flat // tf)

    out_block_bytes = tb * tf * itemsize
    in_block_bytes = tf * itemsize
    needed = 2 * (out_block_bytes + in_block_bytes) + (2 << 20)
    vmem_limit = min(max(needed, 24 << 20), 48 << 20)

    cost = pl.CostEstimate(
        flops=0,
        transcendentals=0,
        bytes_accessed=(batch_size * flat + flat) * itemsize,
    )

    out_2d = pl.pallas_call(
        _broadcast_kernel,
        out_shape=jax.ShapeDtypeStruct((batch_size, flat), dtype),
        grid_spec=pltpu.PrefetchScalarGridSpec(
            num_scalar_prefetch=0,
            grid=grid,
            in_specs=[
                # Same slots lane-tile for every batch step -> resident in VMEM.
                pl.BlockSpec((1, tf), lambda b, f: (0, f)),
            ],
            # TB batch rows x TF lanes per step.
            out_specs=pl.BlockSpec((tb, tf), lambda b, f: (b, f)),
        ),
        compiler_params=pltpu.CompilerParams(
            dimension_semantics=("parallel", "parallel"),
            vmem_limit_bytes=vmem_limit,
        ),
        cost_estimate=cost,
    )(slots_2d)
    return out_2d.reshape(batch_size, n_slots, dim)


class FixedLearnedInit:
    """JAX/Pallas port of the PyTorch FixedLearnedInit module."""

    def __init__(self, n_slots: int, dim: int, initial_std=None,
                 frozen: bool = False, *, key=None, dtype=jnp.float32):
        if initial_std is None:
            initial_std = dim ** (-0.5)
        if key is None:
            key = jax.random.PRNGKey(0)
        # Deterministic synthetic parameter init (matches torch.randn * std semantics).
        self.slots = (jax.random.normal(key, (1, n_slots, dim), dtype=jnp.float32)
                      * float(initial_std)).astype(dtype)
        self.n_slots = n_slots
        self.dim = dim
        self.frozen = frozen  # no-op for inference
        # TODO(synk): for training, gradient flow to `slots` should be handled
        # by the surrounding JAX training loop (parameter is just an array here).

    def __call__(self, batch_size: int) -> jax.Array:
        return fixed_learned_init_forward(self.slots, batch_size)


if __name__ == "__main__":
    ok = True

    # f32, lane-dense flattened path (flat = 8*32 = 256, a multiple of 128).
    mod_f32 = FixedLearnedInit(n_slots=8, dim=32, key=jax.random.PRNGKey(0))
    for bs in (2, 16):
        out = jax.block_until_ready(mod_f32(bs))
        ref = jnp.broadcast_to(mod_f32.slots, (bs, 8, 32))
        ok &= out.shape == ref.shape
        ok &= out.dtype == mod_f32.slots.dtype
        ok &= bool(jnp.array_equal(out, ref))

    # bf16 path: checks dtype-aware sublane handling and dtype preservation.
    mod_bf16 = FixedLearnedInit(n_slots=4, dim=64, key=jax.random.PRNGKey(0),
                                dtype=jnp.bfloat16)
    out = jax.block_until_ready(mod_bf16(32))
    ref = jnp.broadcast_to(mod_bf16.slots, (32, 4, 64))
    ok &= out.shape == ref.shape
    ok &= out.dtype == jnp.bfloat16
    ok &= bool(jnp.array_equal(out, ref))

    # f32 with a non-128-multiple tail (flat = 7*5 = 35): full-extent lane
    # block path (masked tail stores, still exact).
    mod_odd = FixedLearnedInit(n_slots=7, dim=5, key=jax.random.PRNGKey(0))
    out = jax.block_until_ready(mod_odd(4))
    ref = jnp.broadcast_to(mod_odd.slots, (4, 7, 5))
    ok &= out.shape == ref.shape
    ok &= bool(jnp.array_equal(out, ref))

    assert ok
    print("KERNEL_OK")
</pallas_src>

<mosaic_0001>
module attributes {stable_mosaic.version = 11 : i64} {
  func.func @_broadcast_kernel(%arg0: i32, %arg1: i32, %arg2: memref<1x256xf32, #tpu.memory_space<vmem>>, %arg3: memref<2x256xf32, #tpu.memory_space<vmem>>) attributes {dimension_semantics = [#tpu.dimension_semantics<parallel>, #tpu.dimension_semantics<parallel>], iteration_bounds = array<i64: 1, 1>, scalar_prefetch = 0 : i64, scratch_operands = 0 : i64, tpu.core_type = #tpu.core_type<tc>, window_params = [{transform_indices = @transform_0, window_bounds = array<i64: 1, 256>}, {transform_indices = @transform_1, window_bounds = array<i64: 2, 256>}]} {
    %c0 = arith.constant 0 : index
    %c0_0 = arith.constant 0 : index
    %0 = vector.load %arg2[%c0, %c0_0] : memref<1x256xf32, #tpu.memory_space<vmem>>, vector<1x256xf32>
    %1 = vector.shape_cast %0 : vector<1x256xf32> to vector<1x256xf32>
    %2 = vector.broadcast %1 : vector<1x256xf32> to vector<2x256xf32>
    %c0_1 = arith.constant 0 : index
    %c0_2 = arith.constant 0 : index
    %3 = vector.load %arg3[%c0_1, %c0_2] : memref<2x256xf32, #tpu.memory_space<vmem>>, vector<2x256xf32>
    tpu.vector_store %arg3[%c0_1, %c0_2], %2 {strides = array<i32>} : memref<2x256xf32, #tpu.memory_space<vmem>>, vector<2x256xf32>,
    return
  }
  func.func @transform_0(%arg0: i32, %arg1: i32) -> (i32, i32) {
    %c0_i32 = arith.constant 0 : i32
    %c0_i32_0 = arith.constant 0 : i32
    return %c0_i32, %arg1 : i32, i32
  }
  func.func @transform_1(%arg0: i32, %arg1: i32) -> (i32, i32) {
    %c0_i32 = arith.constant 0 : i32
    return %arg0, %arg1 : i32, i32
  }
}

</mosaic_0001>

<llo_original>
// kernel: tpu_custom_call.1
$region0: #{tpu_custom_call.1}
  #allocation0 [shape = 'u32[]', space=smem, size = 0x4, offset = 0x4, fixed_abs, tag = 'smem constant byte address 0x4 - core index']
  #allocation1 [shape = 'u32[144,128]{1,0:T(1,128)}', space=vmem, size = 0x12000, scoped, tag = 'internal scratch']
  %s0 = inlined_call_operand.hbm [shape: f32[1,256], index: 0, kind: input, shape index: {}]
  %s1 = inlined_call_operand.hbm [shape: f32[2,256], index: 1, kind: output, shape index: {}]
  %s2 = sld [smem:[#allocation0]]
  $region18: #{tpu_custom_call.1} parent=0
    _
  %s4 = ssub.s32 1, %s2
  %s5 = scalar_select 0, %s4, %s2
  $region1: #{tpu_custom_call.1} parent=0
    #allocation2 [shape = 'u8[1024]{0}', space=vmem, size = 0x400, scoped, tag = 'input window, operand 0, single buffered']
    #allocation3 [shape = 's32[1]{0}', space=sflag, size = 0x4, scoped, tag = 'scoped memory for tpu_custom_call.1']
    #allocation4 [shape = 's32[1]{0}', space=sflag, size = 0x4, scoped, tag = 'scoped memory for tpu_custom_call.1']
    #allocation5 [shape = 'u8[2048]{0}', space=vmem, size = 0x800, scoped, tag = 'output window, operand 0, single buffered']
    %6 = vsyncpa [#allocation3], 0
    %7 = vsyncpa [#allocation4], 0
    // Predicated region
    $region2: #{tpu_custom_call.1} parent=1 // pred_check
      _
    $region3: #{tpu_custom_call.1} parent=1 // pred_check_branch
      %9 = sbr.rel (0) target = $region5
    $region4: #{tpu_custom_call.1} parent=1 // pred_region
      %s11 = ssub.s32 32, 32
      %12 = vsyncadd [#allocation3], %s11
      %s14 = sshll.u32 [#allocation2], 4
      %s15 = int_to_ptr.vmem [resolvable:$true] %s14
      %17 = dma.hbm_to_vmem [thread:$0]  %s0, 32, %s15, [#allocation3]
    $region5: #{tpu_custom_call.1} parent=1 // pred_fallthru
      _
    // Predicated region
    $region6: #{tpu_custom_call.1} parent=1 // pred_check
      _
    $region7: #{tpu_custom_call.1} parent=1 // pred_check_branch
      %19 = sbr.rel (0) target = $region9
    $region8: #{tpu_custom_call.1} parent=1 // pred_region
      %20 = dma.done [#allocation3], 32
    $region9: #{tpu_custom_call.1} parent=1 // pred_fallthru
      _
    %v21 = vld [vmem:[#allocation2] sm:$0x3]
    %v23 = vlaneseq
    %v24 = vshrl.u32 %v23, 7
    %v25 = vsub.s32 0, %v24
    %v26 = vrot.slane %v21, %v25
    %v27 = vlaneseq
    %v28 = vshrl.u32 %v27, 7
    %v29 = vsub.s32 1, %v28
    %v30 = vrot.slane %v21, %v29
    %v31 = vcombine.low %v26, %v30
    %v33 = vunpack.c.l.s4 1983009808
    %v34 = vunpack.c.0.s8 %v33
    %v35 = vlaneseq
    %v36 = vshrl.u32 %v35, 7
    %v37 = vsub.s32 %v34, %v36
    %v38 = vrot.slane %v31, %v37
    %40 = vst [vmem:[#allocation5] sm:$0xf] %v38
    // Predicated region
    $region10: #{tpu_custom_call.1} parent=1 // pred_check
      _
    $region11: #{tpu_custom_call.1} parent=1 // pred_check_branch
      %42 = sbr.rel (0) target = $region13
    $region12: #{tpu_custom_call.1} parent=1 // pred_region
      %s44 = ssub.s32 64, 64
      %45 = vsyncadd [#allocation4], %s44
      %s47 = sshll.u32 [#allocation5], 4
      %s48 = int_to_ptr.vmem [resolvable:$true] %s47
      %50 = dma.vmem_to_hbm [thread:$0]  %s48, 64, %s1, [#allocation4]
    $region13: #{tpu_custom_call.1} parent=1 // pred_fallthru
      _
    // Predicated region
    $region14: #{tpu_custom_call.1} parent=1 // pred_check
      _
    $region15: #{tpu_custom_call.1} parent=1 // pred_check_branch
      %52 = sbr.rel (0) target = $region17
    $region16: #{tpu_custom_call.1} parent=1 // pred_region
      %53 = dma.done [#allocation4], 64
    $region17: #{tpu_custom_call.1} parent=1 // pred_fallthru
      _
    %54 = vsyncpa [#allocation3], 1
    %55 = vsyncpa [#allocation4], 1

</llo_original>
